<compile_context>
chip_gen: v6e
topology: v6e:2x2x1
jax: 0.10.0
libtpu: 0.0.40
codegen_flags: <defaults>
</compile_context>

<pallas_src>
import math

import jax
import jax.numpy as jnp
import numpy as np
from jax.experimental import pallas as pl
from jax.experimental.pallas import tpu as pltpu

# ----------------------------- config (small, consistent with module) ---------
N_NODES = 128        # total nodes across all graphs
N_GRAPHS = 4         # number of graphs in the batch
E_NODE = 32          # node embedding dim
E_COND = 16          # conditioner embedding dim
MLP_H = 64           # mlp hidden dim
MLP_LAYERS = 3       # -> 2 hidden (Linear+BN+GELU) blocks + final Linear(->3)
OUT_DIM = 3
TILE_N = 128         # = N here -> single grid step; sweep 256..1024 for large N
BN_EPS = 1e-5
MATMUL_DTYPE = jnp.bfloat16   # MXU operand dtype (f32 accumulation)


def _gelu_exact(x):
    # PyTorch nn.GELU() default (approximate='none'): 0.5*x*(1+erf(x/sqrt(2)))
    return 0.5 * x * (1.0 + jax.lax.erf(x * (1.0 / math.sqrt(2.0))))


# ----------------------------- Pallas kernel ----------------------------------
def _make_decoder_kernel(num_extra_hidden, num_graphs_padded):
    """Kernel over one tile of node rows.

    ref order: x (f32), batch_ids (int32 [tile_n,1]), graph_bias ([B_pad,H] f32),
               w1_x, [w_i, b_i] * num_extra_hidden, w_out, b_out, out_ref
    """

    def kernel(*refs):
        x_ref, bid_ref, gbias_ref = refs[0], refs[1], refs[2]
        out_ref = refs[-1]
        idx = 3

        tile_n = x_ref.shape[0]

        # Reconstruct per-row pooled bias: one-hot(tile_n, B_pad) @ graph_bias(B_pad, H).
        gids = jax.lax.broadcasted_iota(jnp.int32, (tile_n, num_graphs_padded), 1)
        onehot = (bid_ref[...] == gids).astype(jnp.float32)
        gb = jnp.dot(onehot, gbias_ref[...], preferred_element_type=jnp.float32)

        # layer 0: per-node (x) part of the Linear; pooled part + folded BN bias is gb.
        w1 = refs[idx]
        idx += 1
        h = jnp.dot(x_ref[...].astype(MATMUL_DTYPE), w1[...],
                    preferred_element_type=jnp.float32)
        h = h + gb
        h = _gelu_exact(h)

        # remaining hidden layers (BN folded into w/b already)
        for _ in range(num_extra_hidden):
            w_ref, b_ref = refs[idx], refs[idx + 1]
            idx += 2
            h = jnp.dot(h.astype(MATMUL_DTYPE), w_ref[...],
                        preferred_element_type=jnp.float32) + b_ref[...]
            h = _gelu_exact(h)

        # output projection, real width (block last dim == array last dim)
        w_out, b_out = refs[idx], refs[idx + 1]
        out = jnp.dot(h.astype(MATMUL_DTYPE), w_out[...],
                      preferred_element_type=jnp.float32) + b_out[...]
        out_ref[...] = out.astype(out_ref.dtype)

    return kernel


def decoder_mlp_pallas(x, batch_ids, graph_bias, params, *, tile_n=TILE_N):
    """Run the decoder MLP in a single Pallas kernel, tiled over node rows.

    x:          [N, E_NODE] f32 (cast to bf16 inside the kernel)
    batch_ids:  [N, 1] int32 graph id per node
    graph_bias: [B_pad, MLP_H] f32 (pooled layer-0 contribution + folded bias)
    """
    n = x.shape[0]
    n_pad = tile_n * pl.cdiv(n, tile_n)
    if n_pad != n:                               # ragged-N: pad rows, slice back later
        pad = n_pad - n
        x = jnp.pad(x, ((0, pad), (0, 0)))
        batch_ids = jnp.pad(batch_ids, ((0, pad), (0, 0)))
    grid = (n_pad // tile_n,)

    b_pad = graph_bias.shape[0]
    num_extra = len(params["hidden"])

    in_arrays = [x, batch_ids, graph_bias, params["w1_x"]]
    in_specs = [
        pl.BlockSpec((tile_n, E_NODE), lambda i: (i, 0)),
        pl.BlockSpec((tile_n, 1), lambda i: (i, 0)),
        pl.BlockSpec(graph_bias.shape, lambda i: (0, 0)),
        pl.BlockSpec(params["w1_x"].shape, lambda i: (0, 0)),
    ]
    for (w, b) in params["hidden"]:
        in_arrays += [w, b]
        in_specs += [pl.BlockSpec(w.shape, lambda i: (0, 0)),
                     pl.BlockSpec(b.shape, lambda i: (0, 0))]
    w_out, b_out = params["out"]
    in_arrays += [w_out, b_out]
    in_specs += [pl.BlockSpec(w_out.shape, lambda i: (0, 0)),
                 pl.BlockSpec(b_out.shape, lambda i: (0, 0))]

    out = pl.pallas_call(
        _make_decoder_kernel(num_extra, b_pad),
        out_shape=jax.ShapeDtypeStruct((n_pad, OUT_DIM), jnp.float32),
        grid_spec=pltpu.PrefetchScalarGridSpec(
            num_scalar_prefetch=0,
            grid=grid,
            in_specs=in_specs,
            out_specs=pl.BlockSpec((tile_n, OUT_DIM), lambda i: (i, 0)),
        ),
        compiler_params=pltpu.CompilerParams(
            dimension_semantics=("parallel",)),
    )(*in_arrays)
    if n_pad != n:
        out = out[:n]
    return out


# ----------------------------- glue: pooling + pooled layer-0 part ------------
def _pooled_graph_bias(x, batch, cond_z_ref, params, num_graphs):
    """[B, MLP_H] = z_global @ W1_zg + cond_global @ W1_cg + b1 (BN folded)."""
    ones = jnp.ones((x.shape[0],), dtype=x.dtype)
    counts = jnp.maximum(
        jax.ops.segment_sum(ones, batch, num_segments=num_graphs), 1.0)[:, None]
    z_global = jax.ops.segment_sum(x, batch, num_segments=num_graphs) / counts
    cond_global = jax.ops.segment_sum(cond_z_ref, batch, num_segments=num_graphs) / counts
    return (z_global @ params["w1_zg"]
            + cond_global @ params["w1_cg"]
            + params["b1"])                       # [B, MLP_H], f32


def protein_state_reconstructor_2d(x, batch, cond_z_ref, params, num_graphs):
    """Full forward pass: segment-mean pooling (tiny, plain XLA) + Pallas MLP."""
    graph_bias = _pooled_graph_bias(x, batch, cond_z_ref, params, num_graphs)
    # pad B up to a multiple of 8 sublanes for a clean constant block in the kernel
    b_pad = 8 * pl.cdiv(num_graphs, 8)
    graph_bias_p = jnp.zeros((b_pad, MLP_H), jnp.float32).at[:num_graphs].set(graph_bias)
    batch_ids = batch.astype(jnp.int32)[:, None]            # [N, 1]
    return decoder_mlp_pallas(x, batch_ids, graph_bias_p, params)


# ----------------------------- deterministic parameter init -------------------
def init_params(key):
    """Params with BatchNorm folded into the Linears, bf16 MXU weights + f32 copies."""
    num_hidden = MLP_LAYERS - 1
    mlp_in = 2 * E_NODE + E_COND
    params = {}
    f32 = {}

    def bn_affine(kg, kb, km, kv, dim):
        gamma = jax.random.uniform(kg, (1, dim), jnp.float32, 0.5, 1.5)
        beta = 0.1 * jax.random.normal(kb, (1, dim), jnp.float32)
        r_mean = 0.1 * jax.random.normal(km, (1, dim), jnp.float32)
        r_var = jax.random.uniform(kv, (1, dim), jnp.float32, 0.5, 1.5)
        scale = gamma / jnp.sqrt(r_var + BN_EPS)
        shift = beta - r_mean * scale
        return scale, shift

    keys = jax.random.split(key, 6 * num_hidden + 2)
    ki = 0

    # layer 0: Linear(mlp_in -> H) + BN, folded; split into x / z_global / cond blocks
    w1 = (1.0 / math.sqrt(mlp_in)) * jax.random.normal(
        keys[ki], (mlp_in, MLP_H), jnp.float32); ki += 1
    b1 = 0.01 * jax.random.normal(keys[ki], (1, MLP_H), jnp.float32); ki += 1
    s1, t1 = bn_affine(keys[ki], keys[ki + 1], keys[ki + 2], keys[ki + 3], MLP_H); ki += 4
    w1f = w1 * s1                        # fold BN scale into weight columns
    b1f = b1 * s1 + t1                   # fold BN shift into bias
    params["w1_x"] = w1f[:E_NODE].astype(MATMUL_DTYPE)       # kernel (bf16)
    f32["w1_x"] = w1f[:E_NODE]
    params["w1_zg"] = w1f[E_NODE:2 * E_NODE]                 # wrapper (f32, tiny)
    params["w1_cg"] = w1f[2 * E_NODE:]                       # wrapper (f32, tiny)
    params["b1"] = b1f                                       # folded bias (f32)

    # remaining hidden layers: Linear(H->H) + BN, folded
    hidden, hidden_f32 = [], []
    for _ in range(1, num_hidden):
        w = (1.0 / math.sqrt(MLP_H)) * jax.random.normal(
            keys[ki], (MLP_H, MLP_H), jnp.float32); ki += 1
        b = 0.01 * jax.random.normal(keys[ki], (1, MLP_H), jnp.float32); ki += 1
        s, t = bn_affine(keys[ki], keys[ki + 1], keys[ki + 2], keys[ki + 3], MLP_H); ki += 4
        wf, bf = w * s, b * s + t
        hidden.append((wf.astype(MATMUL_DTYPE), bf))
        hidden_f32.append((wf, bf))
    params["hidden"] = tuple(hidden)
    f32["hidden"] = tuple(hidden_f32)

    # output layer: Linear(H -> 3), real width
    w_out = (1.0 / math.sqrt(MLP_H)) * jax.random.normal(
        keys[ki], (MLP_H, OUT_DIM), jnp.float32); ki += 1
    b_out = 0.01 * jax.random.normal(keys[ki], (1, OUT_DIM), jnp.float32); ki += 1
    params["out"] = (w_out.astype(MATMUL_DTYPE), b_out)
    f32["out"] = (w_out, b_out)

    params["f32"] = f32
    return params


# ----------------------------- pure-JAX references (for verification) ---------
def reference_forward_bf16(x, batch, cond_z_ref, params, num_graphs):
    """Mirrors the kernel's dtype policy (bf16 MXU operands, f32 accumulation)."""
    gb = _pooled_graph_bias(x, batch, cond_z_ref, params, num_graphs)[batch]
    h = jnp.dot(x.astype(MATMUL_DTYPE), params["w1_x"],
                preferred_element_type=jnp.float32) + gb
    h = _gelu_exact(h)
    for (w, b) in params["hidden"]:
        h = jnp.dot(h.astype(MATMUL_DTYPE), w,
                    preferred_element_type=jnp.float32) + b
        h = _gelu_exact(h)
    w_out, b_out = params["out"]
    return jnp.dot(h.astype(MATMUL_DTYPE), w_out,
                   preferred_element_type=jnp.float32) + b_out


def reference_forward_f32(x, batch, cond_z_ref, params, num_graphs):
    """Exact f32 forward (PyTorch-equivalent eval-mode math, BN folded)."""
    f32 = params["f32"]
    gb = _pooled_graph_bias(x, batch, cond_z_ref, params, num_graphs)[batch]
    h = x @ f32["w1_x"] + gb
    h = _gelu_exact(h)
    for (w, b) in f32["hidden"]:
        h = _gelu_exact(h @ w + b)
    w_out, b_out = f32["out"]
    return h @ w_out + b_out


if __name__ == "__main__":
    key = jax.random.PRNGKey(0)
    kx, kc, kp = jax.random.split(key, 3)

    x = jax.random.normal(kx, (N_NODES, E_NODE), jnp.float32)
    cond_z_ref = jax.random.normal(kc, (N_NODES, E_COND), jnp.float32)
    batch = jnp.repeat(jnp.arange(N_GRAPHS, dtype=jnp.int32), N_NODES // N_GRAPHS)

    params = init_params(kp)

    out = protein_state_reconstructor_2d(x, batch, cond_z_ref, params, N_GRAPHS)
    out = jax.block_until_ready(out)
    assert out.shape == (N_NODES, OUT_DIM)

    # tight check vs. a reference that mirrors the kernel's bf16 policy
    ref_bf16 = reference_forward_bf16(x, batch, cond_z_ref, params, N_GRAPHS)
    np.testing.assert_allclose(np.asarray(out), np.asarray(ref_bf16),
                               rtol=1e-3, atol=1e-3)

    # looser check vs. a pure-f32 (PyTorch-parity, eval-mode) reference
    ref_f32 = reference_forward_f32(x, batch, cond_z_ref, params, N_GRAPHS)
    np.testing.assert_allclose(np.asarray(out), np.asarray(ref_f32),
                               rtol=5e-2, atol=5e-2)

    print("KERNEL_OK")
</pallas_src>

<mosaic_0001>
module attributes {stable_mosaic.version = 11 : i64} {
  func.func @kernel(%arg0: i32, %arg1: memref<128x32xf32, #tpu.memory_space<vmem>>, %arg2: memref<128x1xi32, #tpu.memory_space<vmem>>, %arg3: memref<8x64xf32, #tpu.memory_space<vmem>>, %arg4: memref<32x64xbf16, #tpu.memory_space<vmem>>, %arg5: memref<64x64xbf16, #tpu.memory_space<vmem>>, %arg6: memref<1x64xf32, #tpu.memory_space<vmem>>, %arg7: memref<64x3xbf16, #tpu.memory_space<vmem>>, %arg8: memref<1x3xf32, #tpu.memory_space<vmem>>, %arg9: memref<128x3xf32, #tpu.memory_space<vmem>>) attributes {dimension_semantics = [#tpu.dimension_semantics<parallel>], iteration_bounds = array<i64: 1>, scalar_prefetch = 0 : i64, scratch_operands = 0 : i64, tpu.core_type = #tpu.core_type<tc>, window_params = [{transform_indices = @transform_0, window_bounds = array<i64: 128, 32>}, {transform_indices = @transform_1, window_bounds = array<i64: 128, 1>}, {pipeline_mode = #tpu.pipeline_mode<synchronous>, transform_indices = @transform_2, window_bounds = array<i64: 8, 64>}, {pipeline_mode = #tpu.pipeline_mode<synchronous>, transform_indices = @transform_3, window_bounds = array<i64: 32, 64>}, {pipeline_mode = #tpu.pipeline_mode<synchronous>, transform_indices = @transform_4, window_bounds = array<i64: 64, 64>}, {pipeline_mode = #tpu.pipeline_mode<synchronous>, transform_indices = @transform_5, window_bounds = array<i64: 1, 64>}, {pipeline_mode = #tpu.pipeline_mode<synchronous>, transform_indices = @transform_6, window_bounds = array<i64: 64, 3>}, {pipeline_mode = #tpu.pipeline_mode<synchronous>, transform_indices = @transform_7, window_bounds = array<i64: 1, 3>}, {transform_indices = @transform_8, window_bounds = array<i64: 128, 3>}]} {
    %0 = tpu.iota {dimensions = array<i32: 1>} : vector<128x8xi32>
    %c0 = arith.constant 0 : index
    %c0_0 = arith.constant 0 : index
    %1 = vector.load %arg2[%c0, %c0_0] : memref<128x1xi32, #tpu.memory_space<vmem>>, vector<128x1xi32>
    %2 = vector.broadcast %1 : vector<128x1xi32> to vector<128x8xi32>
    %3 = arith.cmpi eq, %2, %0 : vector<128x8xi32>
    %4 = arith.extui %3 : vector<128x8xi1> to vector<128x8xi32>
    %5 = arith.sitofp %4 : vector<128x8xi32> to vector<128x8xf32>
    %c0_1 = arith.constant 0 : index
    %c0_2 = arith.constant 0 : index
    %6 = vector.load %arg3[%c0_1, %c0_2] : memref<8x64xf32, #tpu.memory_space<vmem>>, vector<8x64xf32>
    %cst = arith.constant dense<0.000000e+00> : vector<128x64xf32>
    %7 = tpu.matmul %5, %6, %cst {dimension_numbers = #tpu.dot_dimension_numbers<[1], [0], [0], [1], [0, 0, 1, 1], [], []>} : vector<128x8xf32>, vector<8x64xf32>, vector<128x64xf32> -> vector<128x64xf32>
    %c0_3 = arith.constant 0 : index
    %c0_4 = arith.constant 0 : index
    %8 = vector.load %arg1[%c0_3, %c0_4] : memref<128x32xf32, #tpu.memory_space<vmem>>, vector<128x32xf32>
    %9 = arith.truncf %8 : vector<128x32xf32> to vector<128x32xbf16>
    %c0_5 = arith.constant 0 : index
    %c0_6 = arith.constant 0 : index
    %10 = vector.load %arg4[%c0_5, %c0_6] : memref<32x64xbf16, #tpu.memory_space<vmem>>, vector<32x64xbf16>
    %cst_7 = arith.constant dense<0.000000e+00> : vector<128x64xf32>
    %11 = tpu.matmul %9, %10, %cst_7 {dimension_numbers = #tpu.dot_dimension_numbers<[1], [0], [0], [1], [0, 0, 1, 1], [], []>} : vector<128x32xbf16>, vector<32x64xbf16>, vector<128x64xf32> -> vector<128x64xf32>
    %12 = arith.addf %11, %7 : vector<128x64xf32>
    %cst_8 = arith.constant 5.000000e-01 : f32
    %13 = vector.broadcast %cst_8 : f32 to vector<128x64xf32>
    %14 = arith.mulf %13, %12 : vector<128x64xf32>
    %cst_9 = arith.constant 0.707106769 : f32
    %15 = vector.broadcast %cst_9 : f32 to vector<128x64xf32>
    %16 = arith.mulf %12, %15 : vector<128x64xf32>
    %17 = math.erf %16 : vector<128x64xf32>
    %cst_10 = arith.constant 1.000000e+00 : f32
    %18 = vector.broadcast %cst_10 : f32 to vector<128x64xf32>
    %19 = arith.addf %18, %17 : vector<128x64xf32>
    %20 = arith.mulf %14, %19 : vector<128x64xf32>
    %21 = arith.truncf %20 : vector<128x64xf32> to vector<128x64xbf16>
    %c0_11 = arith.constant 0 : index
    %c0_12 = arith.constant 0 : index
    %22 = vector.load %arg5[%c0_11, %c0_12] : memref<64x64xbf16, #tpu.memory_space<vmem>>, vector<64x64xbf16>
    %cst_13 = arith.constant dense<0.000000e+00> : vector<128x64xf32>
    %23 = tpu.matmul %21, %22, %cst_13 {dimension_numbers = #tpu.dot_dimension_numbers<[1], [0], [0], [1], [0, 0, 1, 1], [], []>} : vector<128x64xbf16>, vector<64x64xbf16>, vector<128x64xf32> -> vector<128x64xf32>
    %c0_14 = arith.constant 0 : index
    %c0_15 = arith.constant 0 : index
    %24 = vector.load %arg6[%c0_14, %c0_15] : memref<1x64xf32, #tpu.memory_space<vmem>>, vector<1x64xf32>
    %25 = vector.broadcast %24 : vector<1x64xf32> to vector<128x64xf32>
    %26 = arith.addf %23, %25 : vector<128x64xf32>
    %cst_16 = arith.constant 5.000000e-01 : f32
    %27 = vector.broadcast %cst_16 : f32 to vector<128x64xf32>
    %28 = arith.mulf %27, %26 : vector<128x64xf32>
    %cst_17 = arith.constant 0.707106769 : f32
    %29 = vector.broadcast %cst_17 : f32 to vector<128x64xf32>
    %30 = arith.mulf %26, %29 : vector<128x64xf32>
    %31 = math.erf %30 : vector<128x64xf32>
    %cst_18 = arith.constant 1.000000e+00 : f32
    %32 = vector.broadcast %cst_18 : f32 to vector<128x64xf32>
    %33 = arith.addf %32, %31 : vector<128x64xf32>
    %34 = arith.mulf %28, %33 : vector<128x64xf32>
    %35 = arith.truncf %34 : vector<128x64xf32> to vector<128x64xbf16>
    %c0_19 = arith.constant 0 : index
    %c0_20 = arith.constant 0 : index
    %36 = vector.load %arg7[%c0_19, %c0_20] : memref<64x3xbf16, #tpu.memory_space<vmem>>, vector<64x3xbf16>
    %cst_21 = arith.constant dense<0.000000e+00> : vector<128x3xf32>
    %37 = tpu.matmul %35, %36, %cst_21 {dimension_numbers = #tpu.dot_dimension_numbers<[1], [0], [0], [1], [0, 0, 1, 1], [], []>} : vector<128x64xbf16>, vector<64x3xbf16>, vector<128x3xf32> -> vector<128x3xf32>
    %c0_22 = arith.constant 0 : index
    %c0_23 = arith.constant 0 : index
    %38 = vector.load %arg8[%c0_22, %c0_23] : memref<1x3xf32, #tpu.memory_space<vmem>>, vector<1x3xf32>
    %39 = vector.broadcast %38 : vector<1x3xf32> to vector<128x3xf32>
    %40 = arith.addf %37, %39 : vector<128x3xf32>
    %c0_24 = arith.constant 0 : index
    %c0_25 = arith.constant 0 : index
    %41 = vector.load %arg9[%c0_24, %c0_25] : memref<128x3xf32, #tpu.memory_space<vmem>>, vector<128x3xf32>
    tpu.vector_store %arg9[%c0_24, %c0_25], %40 {strides = array<i32>} : memref<128x3xf32, #tpu.memory_space<vmem>>, vector<128x3xf32>,
    return
  }
  func.func @transform_0(%arg0: i32) -> (i32, i32) {
    %c0_i32 = arith.constant 0 : i32
    %c0_i32_0 = arith.constant 0 : i32
    return %arg0, %c0_i32 : i32, i32
  }
  func.func @transform_1(%arg0: i32) -> (i32, i32) {
    %c0_i32 = arith.constant 0 : i32
    %c0_i32_0 = arith.constant 0 : i32
    return %arg0, %c0_i32 : i32, i32
  }
  func.func @transform_2(%arg0: i32) -> (i32, i32) {
    %c0_i32 = arith.constant 0 : i32
    %c0_i32_0 = arith.constant 0 : i32
    %c0_i32_1 = arith.constant 0 : i32
    return %c0_i32, %c0_i32_0 : i32, i32
  }
  func.func @transform_3(%arg0: i32) -> (i32, i32) {
    %c0_i32 = arith.constant 0 : i32
    %c0_i32_0 = arith.constant 0 : i32
    %c0_i32_1 = arith.constant 0 : i32
    return %c0_i32, %c0_i32_0 : i32, i32
  }
  func.func @transform_4(%arg0: i32) -> (i32, i32) {
    %c0_i32 = arith.constant 0 : i32
    %c0_i32_0 = arith.constant 0 : i32
    %c0_i32_1 = arith.constant 0 : i32
    return %c0_i32, %c0_i32_0 : i32, i32
  }
  func.func @transform_5(%arg0: i32) -> (i32, i32) {
    %c0_i32 = arith.constant 0 : i32
    %c0_i32_0 = arith.constant 0 : i32
    %c0_i32_1 = arith.constant 0 : i32
    return %c0_i32, %c0_i32_0 : i32, i32
  }
  func.func @transform_6(%arg0: i32) -> (i32, i32) {
    %c0_i32 = arith.constant 0 : i32
    %c0_i32_0 = arith.constant 0 : i32
    %c0_i32_1 = arith.constant 0 : i32
    return %c0_i32, %c0_i32_0 : i32, i32
  }
  func.func @transform_7(%arg0: i32) -> (i32, i32) {
    %c0_i32 = arith.constant 0 : i32
    %c0_i32_0 = arith.constant 0 : i32
    %c0_i32_1 = arith.constant 0 : i32
    return %c0_i32, %c0_i32_0 : i32, i32
  }
  func.func @transform_8(%arg0: i32) -> (i32, i32) {
    %c0_i32 = arith.constant 0 : i32
    %c0_i32_0 = arith.constant 0 : i32
    return %arg0, %c0_i32 : i32, i32
  }
}

</mosaic_0001>

<llo_original>
// kernel: tpu_custom_call.1
$region0: #{tpu_custom_call.1}
  #allocation0 [shape = 'u32[]', space=smem, size = 0x4, offset = 0x4, fixed_abs, tag = 'smem constant byte address 0x4 - core index']
  #allocation1 [shape = 'u32[144,128]{1,0:T(1,128)}', space=vmem, size = 0x12000, scoped, tag = 'internal scratch']
  %s0 = inlined_call_operand.vmem [shape: f32[128,32], index: 0, kind: input, shape index: {}]
  %s1 = inlined_call_operand.vmem [shape: s32[128,1], index: 1, kind: input, shape index: {}]
  %s2 = inlined_call_operand.vmem [shape: f32[8,64], index: 2, kind: input, shape index: {}]
  %s3 = inlined_call_operand.vmem [shape: bf16[32,64], index: 3, kind: input, shape index: {}]
  %s4 = inlined_call_operand.vmem [shape: bf16[64,64], index: 4, kind: input, shape index: {}]
  %s5 = inlined_call_operand.vmem [shape: f32[1,64], index: 5, kind: input, shape index: {}]
  %s6 = inlined_call_operand.vmem [shape: bf16[64,3], index: 6, kind: input, shape index: {}]
  %s7 = inlined_call_operand.vmem [shape: f32[1,3], index: 7, kind: input, shape index: {}]
  %s8 = inlined_call_operand.vmem [shape: f32[128,3], index: 8, kind: output, shape index: {}]
  %s9 = sld [smem:[#allocation0]]
  $region42: #{tpu_custom_call.1} parent=0
    _
  %s11 = ssub.s32 1, %s9
  %s12 = scalar_select 0, %s11, %s9
  // Predicated region
  $region2: #{tpu_custom_call.1} parent=0 // pred_check
    _
  $region3: #{tpu_custom_call.1} parent=0 // pred_check_branch
    %14 = sbr.rel (0) target = $region5
  $region4: #{tpu_custom_call.1} parent=0 // pred_region
    _
  $region5: #{tpu_custom_call.1} parent=0 // pred_fallthru
    _
  // Predicated region
  $region6: #{tpu_custom_call.1} parent=0 // pred_check
    _
  $region7: #{tpu_custom_call.1} parent=0 // pred_check_branch
    %16 = sbr.rel (0) target = $region9
  $region8: #{tpu_custom_call.1} parent=0 // pred_region
    _
  $region9: #{tpu_custom_call.1} parent=0 // pred_fallthru
    _
  // Predicated region
  $region10: #{tpu_custom_call.1} parent=0 // pred_check
    _
  $region11: #{tpu_custom_call.1} parent=0 // pred_check_branch
    %18 = sbr.rel (0) target = $region13
  $region12: #{tpu_custom_call.1} parent=0 // pred_region
    _
  $region13: #{tpu_custom_call.1} parent=0 // pred_fallthru
    _
  // Predicated region
  $region14: #{tpu_custom_call.1} parent=0 // pred_check
    _
  $region15: #{tpu_custom_call.1} parent=0 // pred_check_branch
    %20 = sbr.rel (0) target = $region17
  $region16: #{tpu_custom_call.1} parent=0 // pred_region
    _
  $region17: #{tpu_custom_call.1} parent=0 // pred_fallthru
    _
  // Predicated region
  $region18: #{tpu_custom_call.1} parent=0 // pred_check
    _
  $region19: #{tpu_custom_call.1} parent=0 // pred_check_branch
    %22 = sbr.rel (0) target = $region21
  $region20: #{tpu_custom_call.1} parent=0 // pred_region
    _
  $region21: #{tpu_custom_call.1} parent=0 // pred_fallthru
    _
  // Predicated region
  $region22: #{tpu_custom_call.1} parent=0 // pred_check
    _
  $region23: #{tpu_custom_call.1} parent=0 // pred_check_branch
    %24 = sbr.rel (0) target = $region25
  $region24: #{tpu_custom_call.1} parent=0 // pred_region
    _
  $region25: #{tpu_custom_call.1} parent=0 // pred_fallthru
    _
  // Predicated region
  $region26: #{tpu_custom_call.1} parent=0 // pred_check
    _
  $region27: #{tpu_custom_call.1} parent=0 // pred_check_branch
    %26 = sbr.rel (0) target = $region29
  $region28: #{tpu_custom_call.1} parent=0 // pred_region
    _
  $region29: #{tpu_custom_call.1} parent=0 // pred_fallthru
    _
  // Predicated region
  $region30: #{tpu_custom_call.1} parent=0 // pred_check
    _
  $region31: #{tpu_custom_call.1} parent=0 // pred_check_branch
    %28 = sbr.rel (0) target = $region33
  $region32: #{tpu_custom_call.1} parent=0 // pred_region
    _
  $region33: #{tpu_custom_call.1} parent=0 // pred_fallthru
    _
  %v30 = vlaneseq
  %v31 = vand.u32 %v30, 127
  %v32 = vld [vmem:[%s1] sm:$0xff]
  %v33 = vld [vmem:[%s1 + $0x8] sm:$0xff]
  %v34 = vld [vmem:[%s1 + $0x10] sm:$0xff]
  %v35 = vld [vmem:[%s1 + $0x18] sm:$0xff]
  %v36 = vld [vmem:[%s1 + $0x20] sm:$0xff]
  %v37 = vld [vmem:[%s1 + $0x28] sm:$0xff]
  %v38 = vld [vmem:[%s1 + $0x30] sm:$0xff]
  %v39 = vld [vmem:[%s1 + $0x38] sm:$0xff]
  %v40 = vld [vmem:[%s1 + $0x40] sm:$0xff]
  %v41 = vld [vmem:[%s1 + $0x48] sm:$0xff]
  %v42 = vld [vmem:[%s1 + $0x50] sm:$0xff]
  %v43 = vld [vmem:[%s1 + $0x58] sm:$0xff]
  %v44 = vld [vmem:[%s1 + $0x60] sm:$0xff]
  %v45 = vld [vmem:[%s1 + $0x68] sm:$0xff]
  %v46 = vld [vmem:[%s1 + $0x70] sm:$0xff]
  %v47 = vld [vmem:[%s1 + $0x78] sm:$0xff]
  %48 = vset.pattern.permute.xlu0 0
  %49 = vperm.xlu0 %48, %v32
  %v50 = vpop.permute.xlu0 %49
  %51 = vset.pattern.permute.xlu0 0
  %52 = vperm.xlu0 %51, %v33
  %v53 = vpop.permute.xlu0 %52
  %54 = vset.pattern.permute.xlu0 0
  %55 = vperm.xlu0 %54, %v34
  %v56 = vpop.permute.xlu0 %55
  %57 = vset.pattern.permute.xlu0 0
  %58 = vperm.xlu0 %57, %v35
  %v59 = vpop.permute.xlu0 %58
  %60 = vset.pattern.permute.xlu0 0
  %61 = vperm.xlu0 %60, %v36
  %v62 = vpop.permute.xlu0 %61
  %63 = vset.pattern.permute.xlu0 0
  %64 = vperm.xlu0 %63, %v37
  %v65 = vpop.permute.xlu0 %64
  %66 = vset.pattern.permute.xlu0 0
  %67 = vperm.xlu0 %66, %v38
  %v68 = vpop.permute.xlu0 %67
  %69 = vset.pattern.permute.xlu0 0
  %70 = vperm.xlu0 %69, %v39
  %v71 = vpop.permute.xlu0 %70
  %72 = vset.pattern.permute.xlu0 0
  %73 = vperm.xlu0 %72, %v40
  %v74 = vpop.permute.xlu0 %73
  %75 = vset.pattern.permute.xlu0 0
  %76 = vperm.xlu0 %75, %v41
  %v77 = vpop.permute.xlu0 %76
  %78 = vset.pattern.permute.xlu0 0
  %79 = vperm.xlu0 %78, %v42
  %v80 = vpop.permute.xlu0 %79
  %81 = vset.pattern.permute.xlu0 0
  %82 = vperm.xlu0 %81, %v43
  %v83 = vpop.permute.xlu0 %82
  %84 = vset.pattern.permute.xlu0 0
  %85 = vperm.xlu0 %84, %v44
  %v86 = vpop.permute.xlu0 %85
  %87 = vset.pattern.permute.xlu0 0
  %88 = vperm.xlu0 %87, %v45
  %v89 = vpop.permute.xlu0 %88
  %90 = vset.pattern.permute.xlu0 0
  %91 = vperm.xlu0 %90, %v46
  %v92 = vpop.permute.xlu0 %91
  %93 = vset.pattern.permute.xlu0 0
  %94 = vperm.xlu0 %93, %v47
  %v95 = vpop.permute.xlu0 %94
  %vm96 = vcmp.eq.s32.totalorder %v50, %v31
  %vm97 = vcmp.eq.s32.totalorder %v53, %v31
  %vm98 = vcmp.eq.s32.totalorder %v56, %v31
  %vm99 = vcmp.eq.s32.totalorder %v59, %v31
  %vm100 = vcmp.eq.s32.totalorder %v62, %v31
  %vm101 = vcmp.eq.s32.totalorder %v65, %v31
  %vm102 = vcmp.eq.s32.totalorder %v68, %v31
  %vm103 = vcmp.eq.s32.totalorder %v71, %v31
  %vm104 = vcmp.eq.s32.totalorder %v74, %v31
  %vm105 = vcmp.eq.s32.totalorder %v77, %v31
  %vm106 = vcmp.eq.s32.totalorder %v80, %v31
  %vm107 = vcmp.eq.s32.totalorder %v83, %v31
  %vm108 = vcmp.eq.s32.totalorder %v86, %v31
  %vm109 = vcmp.eq.s32.totalorder %v89, %v31
  %vm110 = vcmp.eq.s32.totalorder %v92, %v31
  %vm111 = vcmp.eq.s32.totalorder %v95, %v31
  %v112 = vsel %vm96, 1, 0
  %v113 = vsel %vm97, 1, 0
  %v114 = vsel %vm98, 1, 0
  %v115 = vsel %vm99, 1, 0
  %v116 = vsel %vm100, 1, 0
  %v117 = vsel %vm101, 1, 0
  %v118 = vsel %vm102, 1, 0
  %v119 = vsel %vm103, 1, 0
  %v120 = vsel %vm104, 1, 0
  %v121 = vsel %vm105, 1, 0
  %v122 = vsel %vm106, 1, 0
  %v123 = vsel %vm107, 1, 0
  %v124 = vsel %vm108, 1, 0
  %v125 = vsel %vm109, 1, 0
  %v126 = vsel %vm110, 1, 0
  %v127 = vsel %vm111, 1, 0
  %v128 = vcvt.s32.f32 %v112
  %v129 = vcvt.s32.f32 %v113
  %v130 = vcvt.s32.f32 %v114
  %v131 = vcvt.s32.f32 %v115
  %v132 = vcvt.s32.f32 %v116
  %v133 = vcvt.s32.f32 %v117
  %v134 = vcvt.s32.f32 %v118
  %v135 = vcvt.s32.f32 %v119
  %v136 = vcvt.s32.f32 %v120
  %v137 = vcvt.s32.f32 %v121
  %v138 = vcvt.s32.f32 %v122
  %v139 = vcvt.s32.f32 %v123
  %v140 = vcvt.s32.f32 %v124
  %v141 = vcvt.s32.f32 %v125
  %v142 = vcvt.s32.f32 %v126
  %v143 = vcvt.s32.f32 %v127
  %v144 = vld [vmem:[%s2] sm:$0xff]
  %vm145 = vcmask 64512
  %v147 = vsel %vm145, %v128, 0
  %v150 = vsel %vm145, %v129, 0
  %v153 = vsel %vm145, %v130, 0
  %v156 = vsel %vm145, %v131, 0
  %v159 = vsel %vm145, %v132, 0
  %v162 = vsel %vm145, %v133, 0
  %v165 = vsel %vm145, %v134, 0
  %v168 = vsel %vm145, %v135, 0
  %v171 = vsel %vm145, %v136, 0
  %v174 = vsel %vm145, %v137, 0
  %v177 = vsel %vm145, %v138, 0
  %v180 = vsel %vm145, %v139, 0
  %v183 = vsel %vm145, %v140, 0
  %v186 = vsel %vm145, %v141, 0
  %v189 = vsel %vm145, %v142, 0
  %v192 = vsel %vm145, %v143, 0
  %194 = vmatprep.subr.mxu0 0.0
  %195 = vmatpush1.msra.mxu0 0.0
  %196 = vmatprep.subr.mxu0 0.0
  %197 = vmatpush1.msra.mxu0 0.0
  %198 = vmatprep.subr.mxu0 0.0
  %199 = vmatpush1.msra.mxu0 0.0
  %200 = vmatprep.subr.mxu0 0.0
  %201 = vmatpush1.msra.mxu0 0.0
  %202 = vmatprep.subr.mxu0 0.0
  %203 = vmatpush1.msra.mxu0 0.0
  %204 = vmatprep.subr.mxu0 0.0
  %205 = vmatpush1.msra.mxu0 0.0
  %206 = vmatprep.subr.mxu0 0.0
  %207 = vmatpush1.msra.mxu0 0.0
  %208 = vmatprep.subr.mxu0 0.0
  %209 = vmatpush1.msra.mxu0 0.0
  %210 = vmatprep.subr.mxu0 0.0
  %211 = vmatpush1.msra.mxu0 0.0
  %212 = vmatprep.subr.mxu0 0.0
  %213 = vmatpush1.msra.mxu0 0.0
  %214 = vmatprep.subr.mxu0 0.0
  %215 = vmatpush1.msra.mxu0 0.0
  %216 = vmatprep.subr.mxu0 0.0
  %217 = vmatpush1.msra.mxu0 0.0
  %218 = vmatprep.subr.mxu0 0.0
  %219 = vmatpush1.msra.mxu0 0.0
  %220 = vmatprep.subr.mxu0 0.0
  %221 = vmatpush1.msra.mxu0 0.0
  %222 = vmatprep.subr.mxu0 0.0
  %223 = vmatpush1.msra.mxu0 0.0
  %224 = vmatprep.subr.mxu0 0.0
  %225 = vmatpush1.msra.mxu0 %v144
  %226 = vmatprep.subr.mxu0 0.0
  %227 = vmatpush2.msra.mxu0 0.0
  %228 = vmatprep.subr.mxu0 0.0
  %229 = vmatpush2.msra.mxu0 0.0
  %230 = vmatprep.subr.mxu0 0.0
  %231 = vmatpush2.msra.mxu0 0.0
  %232 = vmatprep.subr.mxu0 0.0
  %233 = vmatpush2.msra.mxu0 0.0
  %234 = vmatprep.subr.mxu0 0.0
  %235 = vmatpush2.msra.mxu0 0.0
  %236 = vmatprep.subr.mxu0 0.0
  %237 = vmatpush2.msra.mxu0 0.0
  %238 = vmatprep.subr.mxu0 0.0
  %239 = vmatpush2.msra.mxu0 0.0
  %240 = vmatprep.subr.mxu0 0.0
  %241 = vmatpush2.msra.mxu0 0.0
  %242 = vmatprep.subr.mxu0 0.0
  %243 = vmatpush2.msra.mxu0 0.0
  %244 = vmatprep.subr.mxu0 0.0
  %245 = vmatpush2.msra.mxu0 0.0
  %246 = vmatprep.subr.mxu0 0.0
  %247 = vmatpush2.msra.mxu0 0.0
  %248 = vmatprep.subr.mxu0 0.0
  %249 = vmatpush2.msra.mxu0 0.0
  %250 = vmatprep.subr.mxu0 0.0
  %251 = vmatpush2.msra.mxu0 0.0
  %252 = vmatprep.subr.mxu0 0.0
  %253 = vmatpush2.msra.mxu0 0.0
  %254 = vmatprep.subr.mxu0 0.0
  %255 = vmatpush2.msra.mxu0 0.0
  %256 = vmatprep.subr.mxu0 0.0
  %257 = vmatpush2.msra.mxu0 0.0
  %258 = vmatprep.mubr.f32.mxu0 0.0
  %259 = vmatmul.mubr.f32.gmra.mxu0 %v147
  %v260 = vpop.f32.mrf.mxu0
  %v261 = vadd.f32 0.0, %v260
  %v262 = vpop.f32.mrf.mxu0
  %263 = vmatprep.mubr.f32.mxu0 0.0
  %264 = vmatmul.mubr.f32.gmra.mxu0 %v150
  %v265 = vpop.f32.mrf.mxu0
  %v266 = vadd.f32 0.0, %v265
  %v267 = vpop.f32.mrf.mxu0
  %268 = vmatprep.mubr.f32.mxu0 0.0
  %269 = vmatmul.mubr.f32.gmra.mxu0 %v153
  %v270 = vpop.f32.mrf.mxu0
  %v271 = vadd.f32 0.0, %v270
  %v272 = vpop.f32.mrf.mxu0
  %273 = vmatprep.mubr.f32.mxu0 0.0
  %274 = vmatmul.mubr.f32.gmra.mxu0 %v156
  %v275 = vpop.f32.mrf.mxu0
  %v276 = vadd.f32 0.0, %v275
  %v277 = vpop.f32.mrf.mxu0
  %278 = vmatprep.mubr.f32.mxu0 0.0
  %279 = vmatmul.mubr.f32.gmra.mxu0 %v159
  %v280 = vpop.f32.mrf.mxu0
  %v281 = vadd.f32 0.0, %v280
  %v282 = vpop.f32.mrf.mxu0
  %283 = vmatprep.mubr.f32.mxu0 0.0
  %284 = vmatmul.mubr.f32.gmra.mxu0 %v162
  %v285 = vpop.f32.mrf.mxu0
  %v286 = vadd.f32 0.0, %v285
  %v287 = vpop.f32.mrf.mxu0
  %288 = vmatprep.mubr.f32.mxu0 0.0
  %289 = vmatmul.mubr.f32.gmra.mxu0 %v165
  %v290 = vpop.f32.mrf.mxu0
  %v291 = vadd.f32 0.0, %v290
  %v292 = vpop.f32.mrf.mxu0
  %293 = vmatprep.mubr.f32.mxu0 0.0
  %294 = vmatmul.mubr.f32.gmra.mxu0 %v168
  %v295 = vpop.f32.mrf.mxu0
  %v296 = vadd.f32 0.0, %v295
  %v297 = vpop.f32.mrf.mxu0
  %298 = vmatprep.mubr.f32.mxu0 0.0
  %299 = vmatmul.mubr.f32.gmra.mxu0 %v171
  %v300 = vpop.f32.mrf.mxu0
  %v301 = vadd.f32 0.0, %v300
  %v302 = vpop.f32.mrf.mxu0
  %303 = vmatprep.mubr.f32.mxu0 0.0
  %304 = vmatmul.mubr.f32.gmra.mxu0 %v174
  %v305 = vpop.f32.mrf.mxu0
  %v306 = vadd.f32 0.0, %v305
  %v307 = vpop.f32.mrf.mxu0
  %308 = vmatprep.mubr.f32.mxu0 0.0
  %309 = vmatmul.mubr.f32.gmra.mxu0 %v177
  %v310 = vpop.f32.mrf.mxu0
  %v311 = vadd.f32 0.0, %v310
  %v312 = vpop.f32.mrf.mxu0
  %313 = vmatprep.mubr.f32.mxu0 0.0
  %314 = vmatmul.mubr.f32.gmra.mxu0 %v180
  %v315 = vpop.f32.mrf.mxu0
  %v316 = vadd.f32 0.0, %v315
  %v317 = vpop.f32.mrf.mxu0
  %318 = vmatprep.mubr.f32.mxu0 0.0
  %319 = vmatmul.mubr.f32.gmra.mxu0 %v183
  %v320 = vpop.f32.mrf.mxu0
  %v321 = vadd.f32 0.0, %v320
  %v322 = vpop.f32.mrf.mxu0
  %323 = vmatprep.mubr.f32.mxu0 0.0
  %324 = vmatmul.mubr.f32.gmra.mxu0 %v186
  %v325 = vpop.f32.mrf.mxu0
  %v326 = vadd.f32 0.0, %v325
  %v327 = vpop.f32.mrf.mxu0
  %328 = vmatprep.mubr.f32.mxu0 0.0
  %329 = vmatmul.mubr.f32.gmra.mxu0 %v189
  %v330 = vpop.f32.mrf.mxu0
  %v331 = vadd.f32 0.0, %v330
  %v332 = vpop.f32.mrf.mxu0
  %333 = vmatprep.mubr.f32.mxu0 0.0
  %334 = vmatmul.mubr.f32.gmra.mxu0 %v192
  %v335 = vpop.f32.mrf.mxu0
  %v336 = vadd.f32 0.0, %v335
  %v337 = vpop.f32.mrf.mxu0
  %338 = vdwg.mxu0
  %v339 = vld [vmem:[%s0] sm:$0xff]
  %v340 = vld [vmem:[%s0 + $0x8] sm:$0xff]
  %v341 = vld [vmem:[%s0 + $0x10] sm:$0xff]
  %v342 = vld [vmem:[%s0 + $0x18] sm:$0xff]
  %v343 = vld [vmem:[%s0 + $0x20] sm:$0xff]
  %v344 = vld [vmem:[%s0 + $0x28] sm:$0xff]
  %v345 = vld [vmem:[%s0 + $0x30] sm:$0xff]
  %v346 = vld [vmem:[%s0 + $0x38] sm:$0xff]
  %v347 = vld [vmem:[%s0 + $0x40] sm:$0xff]
  %v348 = vld [vmem:[%s0 + $0x48] sm:$0xff]
  %v349 = vld [vmem:[%s0 + $0x50] sm:$0xff]
  %v350 = vld [vmem:[%s0 + $0x58] sm:$0xff]
  %v351 = vld [vmem:[%s0 + $0x60] sm:$0xff]
  %v352 = vld [vmem:[%s0 + $0x68] sm:$0xff]
  %v353 = vld [vmem:[%s0 + $0x70] sm:$0xff]
  %v354 = vld [vmem:[%s0 + $0x78] sm:$0xff]
  %v355 = vpack.c.bf16 %v340, %v339
  %v356 = vpack.c.bf16 %v342, %v341
  %v357 = vpack.c.bf16 %v344, %v343
  %v358 = vpack.c.bf16 %v346, %v345
  %v359 = vpack.c.bf16 %v348, %v347
  %v360 = vpack.c.bf16 %v350, %v349
  %v361 = vpack.c.bf16 %v352, %v351
  %v362 = vpack.c.bf16 %v354, %v353
  %v363 = vld [vmem:[%s3] sm:$0xf]
  %v364 = vld [vmem:[%s3 + $0x4] sm:$0xf]
  %v365 = vld [vmem:[%s3 + $0x8] sm:$0xf]
  %v366 = vld [vmem:[%s3 + $0xc] sm:$0xf]
  %v371 = vunpack.c.l.b16 %v363
  %v372 = vunpack.c.l.b16 %v364
  %v373 = vunpack.c.l.b16 %v365
  %v374 = vunpack.c.l.b16 %v366
  %v375 = vpack.c.b16 %v372, %v371
  %v376 = vpack.c.b16 %v374, %v373
  %vm379 = vcmask 261120
  %v381 = vsel %vm379, %v355, 0
  %v384 = vsel %vm379, %v356, 0
  %v387 = vsel %vm379, %v357, 0
  %v390 = vsel %vm379, %v358, 0
  %v393 = vsel %vm379, %v359, 0
  %v396 = vsel %vm379, %v360, 0
  %v399 = vsel %vm379, %v361, 0
  %v402 = vsel %vm379, %v362, 0
  %404 = vmatprep.subr.bf16.mxu0 0
  %405 = vmatpush1.bf16.msra.mxu0 0
  %406 = vmatprep.subr.bf16.mxu0 0
  %407 = vmatpush1.bf16.msra.mxu0 0
  %408 = vmatprep.subr.bf16.mxu0 0
  %409 = vmatpush1.bf16.msra.mxu0 0
  %410 = vmatprep.subr.bf16.mxu0 0
  %411 = vmatpush1.bf16.msra.mxu0 0
  %412 = vmatprep.subr.bf16.mxu0 0
  %413 = vmatpush1.bf16.msra.mxu0 0
  %414 = vmatprep.subr.bf16.mxu0 0
  %415 = vmatpush1.bf16.msra.mxu0 0
  %416 = vmatprep.subr.bf16.mxu0 0
  %417 = vmatpush1.bf16.msra.mxu0 %v376
  %418 = vmatprep.subr.bf16.mxu0 0
  %419 = vmatpush1.bf16.msra.mxu0 %v375
  %420 = vmatprep.subr.bf16.mxu0 0
  %421 = vmatpush2.bf16.msra.mxu0 0
  %422 = vmatprep.subr.bf16.mxu0 0
  %423 = vmatpush2.bf16.msra.mxu0 0
  %424 = vmatprep.subr.bf16.mxu0 0
  %425 = vmatpush2.bf16.msra.mxu0 0
  %426 = vmatprep.subr.bf16.mxu0 0
  %427 = vmatpush2.bf16.msra.mxu0 0
  %428 = vmatprep.subr.bf16.mxu0 0
  %429 = vmatpush2.bf16.msra.mxu0 0
  %430 = vmatprep.subr.bf16.mxu0 0
  %431 = vmatpush2.bf16.msra.mxu0 0
  %432 = vmatprep.subr.bf16.mxu0 0
  %433 = vmatpush2.bf16.msra.mxu0 0
  %434 = vmatprep.subr.bf16.mxu0 0
  %435 = vmatpush2.bf16.msra.mxu0 0
  %436 = vmatprep.mubr.bf16.mxu0 0
  %437 = vmatmul.mubr.bf16.gmra.mxu0 %v381
  %v438 = vpop.f32.mrf.mxu0
  %v439 = vadd.f32 %v261, %v438
  %v440 = vpop.f32.mrf.mxu0
  %v441 = vpop.f32.mrf.mxu0
  %v442 = vadd.f32 %v266, %v441
  %v443 = vpop.f32.mrf.mxu0
  %444 = vmatprep.mubr.bf16.mxu0 0
  %445 = vmatmul.mubr.bf16.gmra.mxu0 %v384
  %v446 = vpop.f32.mrf.mxu0
  %v447 = vadd.f32 %v271, %v446
  %v448 = vpop.f32.mrf.mxu0
  %v449 = vpop.f32.mrf.mxu0
  %v450 = vadd.f32 %v276, %v449
  %v451 = vpop.f32.mrf.mxu0
  %452 = vmatprep.mubr.bf16.mxu0 0
  %453 = vmatmul.mubr.bf16.gmra.mxu0 %v387
  %v454 = vpop.f32.mrf.mxu0
  %v455 = vadd.f32 %v281, %v454
  %v456 = vpop.f32.mrf.mxu0
  %v457 = vpop.f32.mrf.mxu0
  %v458 = vadd.f32 %v286, %v457
  %v459 = vpop.f32.mrf.mxu0
  %460 = vmatprep.mubr.bf16.mxu0 0
  %461 = vmatmul.mubr.bf16.gmra.mxu0 %v390
  %v462 = vpop.f32.mrf.mxu0
  %v463 = vadd.f32 %v291, %v462
  %v464 = vpop.f32.mrf.mxu0
  %v465 = vpop.f32.mrf.mxu0
  %v466 = vadd.f32 %v296, %v465
  %v467 = vpop.f32.mrf.mxu0
  %468 = vmatprep.mubr.bf16.mxu0 0
  %469 = vmatmul.mubr.bf16.gmra.mxu0 %v393
  %v470 = vpop.f32.mrf.mxu0
  %v471 = vadd.f32 %v301, %v470
  %v472 = vpop.f32.mrf.mxu0
  %v473 = vpop.f32.mrf.mxu0
  %v474 = vadd.f32 %v306, %v473
  %v475 = vpop.f32.mrf.mxu0
  %476 = vmatprep.mubr.bf16.mxu0 0
  %477 = vmatmul.mubr.bf16.gmra.mxu0 %v396
  %v478 = vpop.f32.mrf.mxu0
  %v479 = vadd.f32 %v311, %v478
  %v480 = vpop.f32.mrf.mxu0
  %v481 = vpop.f32.mrf.mxu0
  %v482 = vadd.f32 %v316, %v481
  %v483 = vpop.f32.mrf.mxu0
  %484 = vmatprep.mubr.bf16.mxu0 0
  %485 = vmatmul.mubr.bf16.gmra.mxu0 %v399
  %v486 = vpop.f32.mrf.mxu0
  %v487 = vadd.f32 %v321, %v486
  %v488 = vpop.f32.mrf.mxu0
  %v489 = vpop.f32.mrf.mxu0
  %v490 = vadd.f32 %v326, %v489
  %v491 = vpop.f32.mrf.mxu0
  %492 = vmatprep.mubr.bf16.mxu0 0
  %493 = vmatmul.mubr.bf16.gmra.mxu0 %v402
  %v494 = vpop.f32.mrf.mxu0
  %v495 = vadd.f32 %v331, %v494
  %v496 = vpop.f32.mrf.mxu0
  %v497 = vpop.f32.mrf.mxu0
  %v498 = vadd.f32 %v336, %v497
  %v499 = vpop.f32.mrf.mxu0
  %500 = vdwg.mxu0
  %v501 = vmul.f32 %v439, 0.5
  %v502 = vmul.f32 %v442, 0.5
  %v503 = vmul.f32 %v447, 0.5
  %v504 = vmul.f32 %v450, 0.5
  %v505 = vmul.f32 %v455, 0.5
  %v506 = vmul.f32 %v458, 0.5
  %v507 = vmul.f32 %v463, 0.5
  %v508 = vmul.f32 %v466, 0.5
  %v509 = vmul.f32 %v471, 0.5
  %v510 = vmul.f32 %v474, 0.5
  %v511 = vmul.f32 %v479, 0.5
  %v512 = vmul.f32 %v482, 0.5
  %v513 = vmul.f32 %v487, 0.5
  %v514 = vmul.f32 %v490, 0.5
  %v515 = vmul.f32 %v495, 0.5
  %v516 = vmul.f32 %v498, 0.5
  %v517 = vmul.f32 %v439, 0.70710677
  %v518 = vmul.f32 %v442, 0.70710677
  %v519 = vmul.f32 %v447, 0.70710677
  %v520 = vmul.f32 %v450, 0.70710677
  %v521 = vmul.f32 %v455, 0.70710677
  %v522 = vmul.f32 %v458, 0.70710677
  %v523 = vmul.f32 %v463, 0.70710677
  %v524 = vmul.f32 %v466, 0.70710677
  %v525 = vmul.f32 %v471, 0.70710677
  %v526 = vmul.f32 %v474, 0.70710677
  %v527 = vmul.f32 %v479, 0.70710677
  %v528 = vmul.f32 %v482, 0.70710677
  %v529 = vmul.f32 %v487, 0.70710677
  %v530 = vmul.f32 %v490, 0.70710677
  %v531 = vmul.f32 %v495, 0.70710677
  %v532 = vmul.f32 %v498, 0.70710677
  %v533 = verf.f32.pop %v517
  %v534 = verf.f32.pop %v518
  %v535 = verf.f32.pop %v519
  %v536 = verf.f32.pop %v520
  %v537 = verf.f32.pop %v521
  %v538 = verf.f32.pop %v522
  %v539 = verf.f32.pop %v523
  %v540 = verf.f32.pop %v524
  %v541 = verf.f32.pop %v525
  %v542 = verf.f32.pop %v526
  %v543 = verf.f32.pop %v527
  %v544 = verf.f32.pop %v528
  %v545 = verf.f32.pop %v529
  %v546 = verf.f32.pop %v530
  %v547 = verf.f32.pop %v531
  %v548 = verf.f32.pop %v532
  %v549 = vadd.f32 %v533, 1.0
  %v550 = vadd.f32 %v534, 1.0
  %v551 = vadd.f32 %v535, 1.0
  %v552 = vadd.f32 %v536, 1.0
  %v553 = vadd.f32 %v537, 1.0
  %v554 = vadd.f32 %v538, 1.0
  %v555 = vadd.f32 %v539, 1.0
  %v556 = vadd.f32 %v540, 1.0
  %v557 = vadd.f32 %v541, 1.0
  %v558 = vadd.f32 %v542, 1.0
  %v559 = vadd.f32 %v543, 1.0
  %v560 = vadd.f32 %v544, 1.0
  %v561 = vadd.f32 %v545, 1.0
  %v562 = vadd.f32 %v546, 1.0
  %v563 = vadd.f32 %v547, 1.0
  %v564 = vadd.f32 %v548, 1.0
  %v565 = vmul.f32 %v501, %v549
  %v566 = vmul.f32 %v502, %v550
  %v567 = vmul.f32 %v503, %v551
  %v568 = vmul.f32 %v504, %v552
  %v569 = vmul.f32 %v505, %v553
  %v570 = vmul.f32 %v506, %v554
  %v571 = vmul.f32 %v507, %v555
  %v572 = vmul.f32 %v508, %v556
  %v573 = vmul.f32 %v509, %v557
  %v574 = vmul.f32 %v510, %v558
  %v575 = vmul.f32 %v511, %v559
  %v576 = vmul.f32 %v512, %v560
  %v577 = vmul.f32 %v513, %v561
  %v578 = vmul.f32 %v514, %v562
  %v579 = vmul.f32 %v515, %v563
  %v580 = vmul.f32 %v516, %v564
  %v581 = vpack.c.bf16 %v566, %v565
  %v582 = vpack.c.bf16 %v568, %v567
  %v583 = vpack.c.bf16 %v570, %v569
  %v584 = vpack.c.bf16 %v572, %v571
  %v585 = vpack.c.bf16 %v574, %v573
  %v586 = vpack.c.bf16 %v576, %v575
  %v587 = vpack.c.bf16 %v578, %v577
  %v588 = vpack.c.bf16 %v580, %v579
  %v589 = vld [vmem:[%s4] sm:$0xf]
  %v590 = vld [vmem:[%s4 + $0x4] sm:$0xf]
  %v591 = vld [vmem:[%s4 + $0x8] sm:$0xf]
  %v592 = vld [vmem:[%s4 + $0xc] sm:$0xf]
  %v593 = vld [vmem:[%s4 + $0x10] sm:$0xf]
  %v594 = vld [vmem:[%s4 + $0x14] sm:$0xf]
  %v595 = vld [vmem:[%s4 + $0x18] sm:$0xf]
  %v596 = vld [vmem:[%s4 + $0x1c] sm:$0xf]
  %v597 = vld [vmem:[%s5] sm:$0x1]
  %v599 = vlaneseq
  %v600 = vshrl.u32 %v599, 7
  %v601 = vsub.s32 0, %v600
  %v602 = vrot.slane %v597, %v601
  %v612 = vunpack.c.l.b16 %v589
  %v613 = vunpack.c.l.b16 %v590
  %v614 = vunpack.c.l.b16 %v591
  %v615 = vunpack.c.l.b16 %v592
  %v616 = vunpack.c.l.b16 %v593
  %v617 = vunpack.c.l.b16 %v594
  %v618 = vunpack.c.l.b16 %v595
  %v619 = vunpack.c.l.b16 %v596
  %v620 = vpack.c.b16 %v613, %v612
  %v621 = vpack.c.b16 %v615, %v614
  %v622 = vpack.c.b16 %v617, %v616
  %v623 = vpack.c.b16 %v619, %v618
  %vm628 = vcmask 523264
  %v630 = vsel %vm628, %v581, 0
  %v633 = vsel %vm628, %v582, 0
  %v636 = vsel %vm628, %v583, 0
  %v639 = vsel %vm628, %v584, 0
  %v642 = vsel %vm628, %v585, 0
  %v645 = vsel %vm628, %v586, 0
  %v648 = vsel %vm628, %v587, 0
  %v651 = vsel %vm628, %v588, 0
  %653 = vmatprep.subr.bf16.mxu0 0
  %654 = vmatpush1.bf16.msra.mxu0 0
  %655 = vmatprep.subr.bf16.mxu0 0
  %656 = vmatpush1.bf16.msra.mxu0 0
  %657 = vmatprep.subr.bf16.mxu0 0
  %658 = vmatpush1.bf16.msra.mxu0 0
  %659 = vmatprep.subr.bf16.mxu0 0
  %660 = vmatpush1.bf16.msra.mxu0 0
  %661 = vmatprep.subr.bf16.mxu0 0
  %662 = vmatpush1.bf16.msra.mxu0 %v623
  %663 = vmatprep.subr.bf16.mxu0 0
  %664 = vmatpush1.bf16.msra.mxu0 %v622
  %665 = vmatprep.subr.bf16.mxu0 0
  %666 = vmatpush1.bf16.msra.mxu0 %v621
  %667 = vmatprep.subr.bf16.mxu0 0
  %668 = vmatpush1.bf16.msra.mxu0 %v620
  %669 = vmatprep.subr.bf16.mxu0 0
  %670 = vmatpush2.bf16.msra.mxu0 0
  %671 = vmatprep.subr.bf16.mxu0 0
  %672 = vmatpush2.bf16.msra.mxu0 0
  %673 = vmatprep.subr.bf16.mxu0 0
  %674 = vmatpush2.bf16.msra.mxu0 0
  %675 = vmatprep.subr.bf16.mxu0 0
  %676 = vmatpush2.bf16.msra.mxu0 0
  %677 = vmatprep.subr.bf16.mxu0 0
  %678 = vmatpush2.bf16.msra.mxu0 0
  %679 = vmatprep.subr.bf16.mxu0 0
  %680 = vmatpush2.bf16.msra.mxu0 0
  %681 = vmatprep.subr.bf16.mxu0 0
  %682 = vmatpush2.bf16.msra.mxu0 0
  %683 = vmatprep.subr.bf16.mxu0 0
  %684 = vmatpush2.bf16.msra.mxu0 0
  %685 = vmatprep.mubr.bf16.mxu0 0
  %686 = vmatmul.mubr.bf16.gmra.mxu0 %v630
  %v687 = vpop.f32.mrf.mxu0
  %v688 = vadd.f32 %v602, %v687
  %v689 = vpop.f32.mrf.mxu0
  %v690 = vpop.f32.mrf.mxu0
  %v691 = vadd.f32 %v602, %v690
  %v692 = vpop.f32.mrf.mxu0
  %693 = vmatprep.mubr.bf16.mxu0 0
  %694 = vmatmul.mubr.bf16.gmra.mxu0 %v633
  %v695 = vpop.f32.mrf.mxu0
  %v696 = vadd.f32 %v602, %v695
  %v697 = vpop.f32.mrf.mxu0
  %v698 = vpop.f32.mrf.mxu0
  %v699 = vadd.f32 %v602, %v698
  %v700 = vpop.f32.mrf.mxu0
  %701 = vmatprep.mubr.bf16.mxu0 0
  %702 = vmatmul.mubr.bf16.gmra.mxu0 %v636
  %v703 = vpop.f32.mrf.mxu0
  %v704 = vadd.f32 %v602, %v703
  %v705 = vpop.f32.mrf.mxu0
  %v706 = vpop.f32.mrf.mxu0
  %v707 = vadd.f32 %v602, %v706
  %v708 = vpop.f32.mrf.mxu0
  %709 = vmatprep.mubr.bf16.mxu0 0
  %710 = vmatmul.mubr.bf16.gmra.mxu0 %v639
  %v711 = vpop.f32.mrf.mxu0
  %v712 = vadd.f32 %v602, %v711
  %v713 = vpop.f32.mrf.mxu0
  %v714 = vpop.f32.mrf.mxu0
  %v715 = vadd.f32 %v602, %v714
  %v716 = vpop.f32.mrf.mxu0
  %717 = vmatprep.mubr.bf16.mxu0 0
  %718 = vmatmul.mubr.bf16.gmra.mxu0 %v642
  %v719 = vpop.f32.mrf.mxu0
  %v720 = vadd.f32 %v602, %v719
  %v721 = vpop.f32.mrf.mxu0
  %v722 = vpop.f32.mrf.mxu0
  %v723 = vadd.f32 %v602, %v722
  %v724 = vpop.f32.mrf.mxu0
  %725 = vmatprep.mubr.bf16.mxu0 0
  %726 = vmatmul.mubr.bf16.gmra.mxu0 %v645
  %v727 = vpop.f32.mrf.mxu0
  %v728 = vadd.f32 %v602, %v727
  %v729 = vpop.f32.mrf.mxu0
  %v730 = vpop.f32.mrf.mxu0
  %v731 = vadd.f32 %v602, %v730
  %v732 = vpop.f32.mrf.mxu0
  %733 = vmatprep.mubr.bf16.mxu0 0
  %734 = vmatmul.mubr.bf16.gmra.mxu0 %v648
  %v735 = vpop.f32.mrf.mxu0
  %v736 = vadd.f32 %v602, %v735
  %v737 = vpop.f32.mrf.mxu0
  %v738 = vpop.f32.mrf.mxu0
  %v739 = vadd.f32 %v602, %v738
  %v740 = vpop.f32.mrf.mxu0
  %741 = vmatprep.mubr.bf16.mxu0 0
  %742 = vmatmul.mubr.bf16.gmra.mxu0 %v651
  %v743 = vpop.f32.mrf.mxu0
  %v744 = vadd.f32 %v602, %v743
  %v745 = vpop.f32.mrf.mxu0
  %v746 = vpop.f32.mrf.mxu0
  %v747 = vadd.f32 %v602, %v746
  %v748 = vpop.f32.mrf.mxu0
  %749 = vdwg.mxu0
  %v750 = vmul.f32 %v688, 0.5
  %v751 = vmul.f32 %v691, 0.5
  %v752 = vmul.f32 %v696, 0.5
  %v753 = vmul.f32 %v699, 0.5
  %v754 = vmul.f32 %v704, 0.5
  %v755 = vmul.f32 %v707, 0.5
  %v756 = vmul.f32 %v712, 0.5
  %v757 = vmul.f32 %v715, 0.5
  %v758 = vmul.f32 %v720, 0.5
  %v759 = vmul.f32 %v723, 0.5
  %v760 = vmul.f32 %v728, 0.5
  %v761 = vmul.f32 %v731, 0.5
  %v762 = vmul.f32 %v736, 0.5
  %v763 = vmul.f32 %v739, 0.5
  %v764 = vmul.f32 %v744, 0.5
  %v765 = vmul.f32 %v747, 0.5
  %v766 = vmul.f32 %v688, 0.70710677
  %v767 = vmul.f32 %v691, 0.70710677
  %v768 = vmul.f32 %v696, 0.70710677
  %v769 = vmul.f32 %v699, 0.70710677
  %v770 = vmul.f32 %v704, 0.70710677
  %v771 = vmul.f32 %v707, 0.70710677
  %v772 = vmul.f32 %v712, 0.70710677
  %v773 = vmul.f32 %v715, 0.70710677
  %v774 = vmul.f32 %v720, 0.70710677
  %v775 = vmul.f32 %v723, 0.70710677
  %v776 = vmul.f32 %v728, 0.70710677
  %v777 = vmul.f32 %v731, 0.70710677
  %v778 = vmul.f32 %v736, 0.70710677
  %v779 = vmul.f32 %v739, 0.70710677
  %v780 = vmul.f32 %v744, 0.70710677
  %v781 = vmul.f32 %v747, 0.70710677
  %v782 = verf.f32.pop %v766
  %v783 = verf.f32.pop %v767
  %v784 = verf.f32.pop %v768
  %v785 = verf.f32.pop %v769
  %v786 = verf.f32.pop %v770
  %v787 = verf.f32.pop %v771
  %v788 = verf.f32.pop %v772
  %v789 = verf.f32.pop %v773
  %v790 = verf.f32.pop %v774
  %v791 = verf.f32.pop %v775
  %v792 = verf.f32.pop %v776
  %v793 = verf.f32.pop %v777
  %v794 = verf.f32.pop %v778
  %v795 = verf.f32.pop %v779
  %v796 = verf.f32.pop %v780
  %v797 = verf.f32.pop %v781
  %v798 = vadd.f32 %v782, 1.0
  %v799 = vadd.f32 %v783, 1.0
  %v800 = vadd.f32 %v784, 1.0
  %v801 = vadd.f32 %v785, 1.0
  %v802 = vadd.f32 %v786, 1.0
  %v803 = vadd.f32 %v787, 1.0
  %v804 = vadd.f32 %v788, 1.0
  %v805 = vadd.f32 %v789, 1.0
  %v806 = vadd.f32 %v790, 1.0
  %v807 = vadd.f32 %v791, 1.0
  %v808 = vadd.f32 %v792, 1.0
  %v809 = vadd.f32 %v793, 1.0
  %v810 = vadd.f32 %v794, 1.0
  %v811 = vadd.f32 %v795, 1.0
  %v812 = vadd.f32 %v796, 1.0
  %v813 = vadd.f32 %v797, 1.0
  %v814 = vmul.f32 %v750, %v798
  %v815 = vmul.f32 %v751, %v799
  %v816 = vmul.f32 %v752, %v800
  %v817 = vmul.f32 %v753, %v801
  %v818 = vmul.f32 %v754, %v802
  %v819 = vmul.f32 %v755, %v803
  %v820 = vmul.f32 %v756, %v804
  %v821 = vmul.f32 %v757, %v805
  %v822 = vmul.f32 %v758, %v806
  %v823 = vmul.f32 %v759, %v807
  %v824 = vmul.f32 %v760, %v808
  %v825 = vmul.f32 %v761, %v809
  %v826 = vmul.f32 %v762, %v810
  %v827 = vmul.f32 %v763, %v811
  %v828 = vmul.f32 %v764, %v812
  %v829 = vmul.f32 %v765, %v813
  %v830 = vpack.c.bf16 %v815, %v814
  %v831 = vpack.c.bf16 %v817, %v816
  %v832 = vpack.c.bf16 %v819, %v818
  %v833 = vpack.c.bf16 %v821, %v820
  %v834 = vpack.c.bf16 %v823, %v822
  %v835 = vpack.c.bf16 %v825, %v824
  %v836 = vpack.c.bf16 %v827, %v826
  %v837 = vpack.c.bf16 %v829, %v828
  %v838 = vld [vmem:[%s6] sm:$0xf]
  %v839 = vld [vmem:[%s6 + $0x4] sm:$0xf]
  %v840 = vld [vmem:[%s6 + $0x8] sm:$0xf]
  %v841 = vld [vmem:[%s6 + $0xc] sm:$0xf]
  %v842 = vld [vmem:[%s6 + $0x10] sm:$0xf]
  %v843 = vld [vmem:[%s6 + $0x14] sm:$0xf]
  %v844 = vld [vmem:[%s6 + $0x18] sm:$0xf]
  %v845 = vld [vmem:[%s6 + $0x1c] sm:$0xf]
  %v846 = vld [vmem:[%s7] sm:$0x1]
  %v848 = vlaneseq
  %v849 = vshrl.u32 %v848, 7
  %v850 = vsub.s32 0, %v849
  %v851 = vrot.slane %v846, %v850
  %v861 = vunpack.c.l.b16 %v838
  %v862 = vunpack.c.l.b16 %v839
  %v863 = vunpack.c.l.b16 %v840
  %v864 = vunpack.c.l.b16 %v841
  %v865 = vunpack.c.l.b16 %v842
  %v866 = vunpack.c.l.b16 %v843
  %v867 = vunpack.c.l.b16 %v844
  %v868 = vunpack.c.l.b16 %v845
  %v869 = vpack.c.b16 %v862, %v861
  %v870 = vpack.c.b16 %v864, %v863
  %v871 = vpack.c.b16 %v866, %v865
  %v872 = vpack.c.b16 %v868, %v867
  %v878 = vsel %vm628, %v830, 0
  %v881 = vsel %vm628, %v831, 0
  %v884 = vsel %vm628, %v832, 0
  %v887 = vsel %vm628, %v833, 0
  %v890 = vsel %vm628, %v834, 0
  %v893 = vsel %vm628, %v835, 0
  %v896 = vsel %vm628, %v836, 0
  %v899 = vsel %vm628, %v837, 0
  %901 = vmatprep.subr.bf16.mxu0 0
  %902 = vmatpush1.bf16.msra.mxu0 0
  %903 = vmatprep.subr.bf16.mxu0 0
  %904 = vmatpush1.bf16.msra.mxu0 0
  %905 = vmatprep.subr.bf16.mxu0 0
  %906 = vmatpush1.bf16.msra.mxu0 0
  %907 = vmatprep.subr.bf16.mxu0 0
  %908 = vmatpush1.bf16.msra.mxu0 0
  %909 = vmatprep.subr.bf16.mxu0 0
  %910 = vmatpush1.bf16.msra.mxu0 %v872
  %911 = vmatprep.subr.bf16.mxu0 0
  %912 = vmatpush1.bf16.msra.mxu0 %v871
  %913 = vmatprep.subr.bf16.mxu0 0
  %914 = vmatpush1.bf16.msra.mxu0 %v870
  %915 = vmatprep.subr.bf16.mxu0 0
  %916 = vmatpush1.bf16.msra.mxu0 %v869
  %917 = vmatprep.subr.bf16.mxu0 0
  %918 = vmatpush2.bf16.msra.mxu0 0
  %919 = vmatprep.subr.bf16.mxu0 0
  %920 = vmatpush2.bf16.msra.mxu0 0
  %921 = vmatprep.subr.bf16.mxu0 0
  %922 = vmatpush2.bf16.msra.mxu0 0
  %923 = vmatprep.subr.bf16.mxu0 0
  %924 = vmatpush2.bf16.msra.mxu0 0
  %925 = vmatprep.subr.bf16.mxu0 0
  %926 = vmatpush2.bf16.msra.mxu0 0
  %927 = vmatprep.subr.bf16.mxu0 0
  %928 = vmatpush2.bf16.msra.mxu0 0
  %929 = vmatprep.subr.bf16.mxu0 0
  %930 = vmatpush2.bf16.msra.mxu0 0
  %931 = vmatprep.subr.bf16.mxu0 0
  %932 = vmatpush2.bf16.msra.mxu0 0
  %933 = vmatprep.mubr.bf16.mxu0 0
  %934 = vmatmul.mubr.bf16.gmra.mxu0 %v878
  %v935 = vpop.f32.mrf.mxu0
  %v936 = vadd.f32 %v851, %v935
  %v937 = vpop.f32.mrf.mxu0
  %v938 = vpop.f32.mrf.mxu0
  %v939 = vadd.f32 %v851, %v938
  %v940 = vpop.f32.mrf.mxu0
  %941 = vmatprep.mubr.bf16.mxu0 0
  %942 = vmatmul.mubr.bf16.gmra.mxu0 %v881
  %v943 = vpop.f32.mrf.mxu0
  %v944 = vadd.f32 %v851, %v943
  %v945 = vpop.f32.mrf.mxu0
  %v946 = vpop.f32.mrf.mxu0
  %v947 = vadd.f32 %v851, %v946
  %v948 = vpop.f32.mrf.mxu0
  %949 = vmatprep.mubr.bf16.mxu0 0
  %950 = vmatmul.mubr.bf16.gmra.mxu0 %v884
  %v951 = vpop.f32.mrf.mxu0
  %v952 = vadd.f32 %v851, %v951
  %v953 = vpop.f32.mrf.mxu0
  %v954 = vpop.f32.mrf.mxu0
  %v955 = vadd.f32 %v851, %v954
  %v956 = vpop.f32.mrf.mxu0
  %957 = vmatprep.mubr.bf16.mxu0 0
  %958 = vmatmul.mubr.bf16.gmra.mxu0 %v887
  %v959 = vpop.f32.mrf.mxu0
  %v960 = vadd.f32 %v851, %v959
  %v961 = vpop.f32.mrf.mxu0
  %v962 = vpop.f32.mrf.mxu0
  %v963 = vadd.f32 %v851, %v962
  %v964 = vpop.f32.mrf.mxu0
  %965 = vmatprep.mubr.bf16.mxu0 0
  %966 = vmatmul.mubr.bf16.gmra.mxu0 %v890
  %v967 = vpop.f32.mrf.mxu0
  %v968 = vadd.f32 %v851, %v967
  %v969 = vpop.f32.mrf.mxu0
  %v970 = vpop.f32.mrf.mxu0
  %v971 = vadd.f32 %v851, %v970
  %v972 = vpop.f32.mrf.mxu0
  %973 = vmatprep.mubr.bf16.mxu0 0
  %974 = vmatmul.mubr.bf16.gmra.mxu0 %v893
  %v975 = vpop.f32.mrf.mxu0
  %v976 = vadd.f32 %v851, %v975
  %v977 = vpop.f32.mrf.mxu0
  %v978 = vpop.f32.mrf.mxu0
  %v979 = vadd.f32 %v851, %v978
  %v980 = vpop.f32.mrf.mxu0
  %981 = vmatprep.mubr.bf16.mxu0 0
  %982 = vmatmul.mubr.bf16.gmra.mxu0 %v896
  %v983 = vpop.f32.mrf.mxu0
  %v984 = vadd.f32 %v851, %v983
  %v985 = vpop.f32.mrf.mxu0
  %v986 = vpop.f32.mrf.mxu0
  %v987 = vadd.f32 %v851, %v986
  %v988 = vpop.f32.mrf.mxu0
  %989 = vmatprep.mubr.bf16.mxu0 0
  %990 = vmatmul.mubr.bf16.gmra.mxu0 %v899
  %v991 = vpop.f32.mrf.mxu0
  %v992 = vadd.f32 %v851, %v991
  %v993 = vpop.f32.mrf.mxu0
  %v994 = vpop.f32.mrf.mxu0
  %v995 = vadd.f32 %v851, %v994
  %v996 = vpop.f32.mrf.mxu0
  %997 = vdwg.mxu0
  %vm998 = vcmask 23552
  %999 = vst.msk [vmem:[%s8] sm:$0xff] %vm998, %v936
  %1000 = vst.msk [vmem:[%s8 + $0x8] sm:$0xff] %vm998, %v939
  %1001 = vst.msk [vmem:[%s8 + $0x10] sm:$0xff] %vm998, %v944
  %1002 = vst.msk [vmem:[%s8 + $0x18] sm:$0xff] %vm998, %v947
  %1003 = vst.msk [vmem:[%s8 + $0x20] sm:$0xff] %vm998, %v952
  %1004 = vst.msk [vmem:[%s8 + $0x28] sm:$0xff] %vm998, %v955
  %1005 = vst.msk [vmem:[%s8 + $0x30] sm:$0xff] %vm998, %v960
  %1006 = vst.msk [vmem:[%s8 + $0x38] sm:$0xff] %vm998, %v963
  %1007 = vst.msk [vmem:[%s8 + $0x40] sm:$0xff] %vm998, %v968
  %1008 = vst.msk [vmem:[%s8 + $0x48] sm:$0xff] %vm998, %v971
  %1009 = vst.msk [vmem:[%s8 + $0x50] sm:$0xff] %vm998, %v976
  %1010 = vst.msk [vmem:[%s8 + $0x58] sm:$0xff] %vm998, %v979
  %1011 = vst.msk [vmem:[%s8 + $0x60] sm:$0xff] %vm998, %v984
  %1012 = vst.msk [vmem:[%s8 + $0x68] sm:$0xff] %vm998, %v987
  %1013 = vst.msk [vmem:[%s8 + $0x70] sm:$0xff] %vm998, %v992
  %1014 = vst.msk [vmem:[%s8 + $0x78] sm:$0xff] %vm998, %v995
  // Predicated region
  $region34: #{tpu_custom_call.1} parent=0 // pred_check
    _
  $region35: #{tpu_custom_call.1} parent=0 // pred_check_branch
    %1016 = sbr.rel (0) target = $region37
  $region36: #{tpu_custom_call.1} parent=0 // pred_region
    _
  $region37: #{tpu_custom_call.1} parent=0 // pred_fallthru
    _
  // Predicated region
  $region38: #{tpu_custom_call.1} parent=0 // pred_check
    _
  $region39: #{tpu_custom_call.1} parent=0 // pred_check_branch
    %1018 = sbr.rel (0) target = $region41
  $region40: #{tpu_custom_call.1} parent=0 // pred_region
    _
  $region41: #{tpu_custom_call.1} parent=0 // pred_fallthru
    _

</llo_original>
